<compile_context>
chip_gen: v7x
topology: tpu7x:2x2x1
jax: 0.10.0
libtpu: 0.0.40
codegen_flags: <defaults>
</compile_context>

<pallas_src>
import functools

import jax
import jax.numpy as jnp
from jax import lax
from jax.experimental import pallas as pl
from jax.experimental.pallas import tpu as pltpu

BN_EPS = 1e-5
_LANE = 128
_MAX_TM = 2048
_TARGET_BLOCK_BYTES = 4 * 1024 * 1024     # ~4 MiB bf16 patch block per grid step
_VMEM_LIMIT = 40 * 1024 * 1024            # safe on v7x (64 MiB physical VMEM)


def _round_up(x, m):
    return ((x + m - 1) // m) * m


def _pick_tm(M, Kp):
    """M-tile size: ~4 MiB of bf16 patch rows, multiple of 16, <= M."""
    tm = (_TARGET_BLOCK_BYTES // (Kp * 2)) // 16 * 16
    return int(max(16, min(_MAX_TM, M, tm)))


# ---------------------------------------------------------------------------
# Pallas kernel: tiled (over M) matmul + per-channel shift + activation
# ---------------------------------------------------------------------------
def _mm_bias_act_kernel(p_ref, w_ref, shift_ref, o_ref, *, activation):
    acc = jnp.dot(p_ref[...], w_ref[...], preferred_element_type=jnp.float32)
    y = acc + shift_ref[...]
    if activation == "relu":
        y = jnp.maximum(y, 0.0)
    elif activation == "sigmoid":
        y = jax.nn.sigmoid(y)
    o_ref[...] = y.astype(o_ref.dtype)


def matmul_bias_act(patches, weight, shift, activation, out_dtype=jnp.bfloat16):
    """(M,Kp) bf16 @ (Kp,Np) bf16 -> out_dtype, + shift (1,Np), + activation.

    Kp, Np are already multiples of 128 (lane-dense loads/stores, clean MXU
    feed).  Rows are padded to a multiple of 16 only when needed; ragged last
    M tiles are handled by Pallas boundary clipping.
    """
    M0, Kp = patches.shape
    _, Np = weight.shape
    M = _round_up(M0, 16)
    if M != M0:
        patches = jnp.pad(patches, ((0, M - M0), (0, 0)))
    tm = _pick_tm(M, Kp)
    grid = (pl.cdiv(M, tm),)

    out = pl.pallas_call(
        functools.partial(_mm_bias_act_kernel, activation=activation),
        out_shape=jax.ShapeDtypeStruct((M, Np), out_dtype),
        grid=grid,
        in_specs=[
            pl.BlockSpec((tm, Kp), lambda i: (i, 0)),   # patch tile
            pl.BlockSpec((Kp, Np), lambda i: (0, 0)),   # full (scaled) weight
            pl.BlockSpec((1, Np), lambda i: (0, 0)),    # per-channel shift
        ],
        out_specs=pl.BlockSpec((tm, Np), lambda i: (i, 0)),
        compiler_params=pltpu.CompilerParams(
            dimension_semantics=("parallel",),
            vmem_limit_bytes=_VMEM_LIMIT,
        ),
    )(patches, weight, shift)
    if M != M0:
        out = out[:M0]
    return out


# ---------------------------------------------------------------------------
# JAX glue: BN folding, channels-last im2col, conv wrappers
# ---------------------------------------------------------------------------
def _fold_affine(bias, bn):
    cout = bias.shape[0]
    if bn is None:
        return jnp.ones((cout,), jnp.float32), bias.astype(jnp.float32)
    gamma, beta, rmean, rvar = bn
    a = gamma / jnp.sqrt(rvar + BN_EPS)
    return a, beta + (bias - rmean) * a


def _im2col_cl(x, k, stride, padding, k_pad_to):
    """Channels-last im2col: x (B,D,H,W,C) -> bf16 patches
    (B*Do*Ho*Wo, k_pad_to), column order (kd, kh, kw, ci)."""
    B, D, H, W, C = x.shape
    xp = jnp.pad(x.astype(jnp.bfloat16),
                 ((0, 0), (padding,) * 2, (padding,) * 2, (padding,) * 2,
                  (0, 0)))
    Do = (D + 2 * padding - k) // stride + 1
    Ho = (H + 2 * padding - k) // stride + 1
    Wo = (W + 2 * padding - k) // stride + 1
    pieces = []
    for kd in range(k):
        for kh in range(k):
            for kw in range(k):
                pieces.append(
                    xp[:,
                       kd:kd + stride * (Do - 1) + 1:stride,
                       kh:kh + stride * (Ho - 1) + 1:stride,
                       kw:kw + stride * (Wo - 1) + 1:stride,
                       :])
    K = k * k * k * C
    if k_pad_to != K:
        pieces.append(jnp.zeros((B, Do, Ho, Wo, k_pad_to - K), jnp.bfloat16))
    patches = jnp.concatenate(pieces, axis=-1)
    return patches.reshape(B * Do * Ho * Wo, k_pad_to), (Do, Ho, Wo)


def conv3d(x, wb, stride, padding, bn=None, act="none",
           out_dtype=jnp.bfloat16):
    """PyTorch-semantics Conv3d on channels-last activations (B,D,H,W,C)."""
    w, b = wb                                    # (Cout, Cin, k, k, k)
    Cout, Cin, k = w.shape[0], w.shape[1], w.shape[2]
    K = Cin * k ** 3
    Kp = _round_up(K, _LANE)
    Np = _round_up(Cout, _LANE)

    scale, shift = _fold_affine(b, bn)
    wmat = w.transpose(2, 3, 4, 1, 0).reshape(K, Cout) * scale[None, :]
    wmat = jnp.pad(wmat, ((0, Kp - K), (0, Np - Cout))).astype(jnp.bfloat16)
    shiftp = jnp.pad(shift, (0, Np - Cout)).reshape(1, Np).astype(jnp.float32)

    patches, (Do, Ho, Wo) = _im2col_cl(x, k, stride, padding, Kp)
    y = matmul_bias_act(patches, wmat, shiftp, act, out_dtype=out_dtype)
    B = x.shape[0]
    return y[:, :Cout].reshape(B, Do, Ho, Wo, Cout)


def conv3d_toeplitz_w(x, wb, stride, padding, bn=None, act="none",
                      out_dtype=jnp.bfloat16):
    """Conv3d with the kw taps folded into a width-Toeplitz weight.

    The HBM patch matrix only unrolls (kd, kh) (k^2/stride^2 blow-up instead
    of k^3/stride^3); the width taps become a banded (w -> wo*co) weight, so
    the whole conv is still ONE fused Pallas matmul.  Best when Cin is small
    (conv_scan1: Cin=1, k=8) so the banded weight stays small.
    """
    w, b = wb                                    # (Cout, Cin, k, k, k)
    Cout, Cin, k = w.shape[0], w.shape[1], w.shape[2]
    B, D, H, W, _ = x.shape
    Do = (D + 2 * padding - k) // stride + 1
    Ho = (H + 2 * padding - k) // stride + 1
    Wo = (W + 2 * padding - k) // stride + 1
    Wp = W + 2 * padding

    scale, shift = _fold_affine(b, bn)
    wc = w.transpose(2, 3, 4, 1, 0).astype(jnp.float32) * scale  # (kd,kh,kw,ci,co)

    # W_toe[(kd,kh,w,ci), (wo,co)] = wc[kd,kh, w - stride*wo, ci, co] (banded).
    Wt = jnp.zeros((k, k, Wp, Cin, Wo, Cout), jnp.float32)
    wo = jnp.arange(Wo)
    for kw in range(k):
        Wt = Wt.at[:, :, stride * wo + kw, :, wo, :].set(wc[:, :, kw, :, :][None])

    K = k * k * Wp * Cin
    N = Wo * Cout
    Kp = _round_up(K, _LANE)
    Np = _round_up(N, _LANE)
    wmat = jnp.pad(Wt.reshape(K, N),
                   ((0, Kp - K), (0, Np - N))).astype(jnp.bfloat16)
    shift2 = jnp.tile(shift.astype(jnp.float32), Wo)     # (wo, co), co fastest
    shift2 = jnp.pad(shift2, (0, Np - N)).reshape(1, Np)

    xp = jnp.pad(x.astype(jnp.bfloat16),
                 ((0, 0), (padding,) * 2, (padding,) * 2, (padding,) * 2,
                  (0, 0)))
    pieces = [xp[:,
                 kd:kd + stride * (Do - 1) + 1:stride,
                 kh:kh + stride * (Ho - 1) + 1:stride,
                 :, :].reshape(B, Do, Ho, Wp * Cin)
              for kd in range(k) for kh in range(k)]
    P = jnp.concatenate(pieces, axis=-1).reshape(B * Do * Ho, K)
    if Kp != K:
        P = jnp.pad(P, ((0, 0), (0, Kp - K)))

    Y = matmul_bias_act(P, wmat, shift2, act, out_dtype=out_dtype)
    return Y[:, :N].reshape(B, Do, Ho, Wo, Cout)


def conv_transpose3d_s2(x, wb, bn=None, act="none"):
    """ConvTranspose3d(kernel=4, stride=2, padding=1), channels-last, via a
    sub-pixel decomposition: one k=2/s=1 conv over the 1-padded input whose
    8*Cout columns are the 8 output parities (no zero-dilated input).  bf16
    throughout, including the parity reassembly."""
    w_t, bias = wb                               # (Cin, Cout, 4, 4, 4)
    Cin, Cout = w_t.shape[0], w_t.shape[1]
    assert w_t.shape[2:] == (4, 4, 4)
    B, D, H, W, _ = x.shape

    scale, shift = _fold_affine(bias, bn)

    # Rows ordered (jd, jh, jw, ci); columns ordered (rho = rd*4+rh*2+rw, co).
    # Parity r output 2m+r reads 1-padded positions m+r+j with ConvT tap
    # (3 - r) - 2j  (derived from od = 2*id - 1 + kd).
    wall = jnp.zeros((2, 2, 2, Cin, 8, Cout), jnp.float32)
    for rd in range(2):
        for rh in range(2):
            for rw in range(2):
                rho = rd * 4 + rh * 2 + rw
                for jd in range(2):
                    for jh in range(2):
                        for jw in range(2):
                            tap = w_t[:, :, 3 - rd - 2 * jd,
                                      3 - rh - 2 * jh, 3 - rw - 2 * jw]
                            wall = wall.at[jd, jh, jw, :, rho, :].set(
                                tap * scale[None, :])
    K = 8 * Cin
    N = 8 * Cout
    Kp = _round_up(K, _LANE)
    Np = _round_up(N, _LANE)
    wall = wall.reshape(K, N)
    wall = jnp.pad(wall, ((0, Kp - K), (0, Np - N))).astype(jnp.bfloat16)
    shift8 = jnp.tile(shift, 8)
    shift8 = jnp.pad(shift8, (0, Np - N)).reshape(1, Np).astype(jnp.float32)

    xp = jnp.pad(x, ((0, 0), (1, 1), (1, 1), (1, 1), (0, 0)))
    patches, (D1, H1, W1) = _im2col_cl(xp, 2, 1, 0, Kp)      # D1 = D+1, ...
    out = matmul_bias_act(patches, wall, shift8, act, out_dtype=jnp.bfloat16)
    out = out[:, :N].reshape(B, D1, H1, W1, 8, Cout)

    subs = []
    for rd in range(2):
        for rh in range(2):
            for rw in range(2):
                rho = rd * 4 + rh * 2 + rw
                subs.append(out[:, rd:rd + D, rh:rh + H, rw:rw + W, rho, :])
    y = jnp.stack(subs, axis=4)                  # (B, D, H, W, 8, Cout) bf16
    y = y.reshape(B, D, H, W, 2, 2, 2, Cout)
    y = y.transpose(0, 1, 4, 2, 5, 3, 6, 7)      # (B, D,2, H,2, W,2, C)
    return y.reshape(B, 2 * D, 2 * H, 2 * W, Cout)


def conv_transpose3d_s1_toeplitz(x, wb, padding, act="none",
                                 out_dtype=jnp.float32):
    """ConvTranspose3d with stride 1 via a width-Toeplitz matmul.

    Folds the kw taps into the weight's N axis (banded (w -> wo) structure) so
    the HBM-side "im2col" is just the zero-padded input reshaped (no k^2/k^3
    blow-up).  The remaining (kd, kh) taps are combined with a cheap k^2-term
    shifted-slice sum in XLA.  Bias + activation are applied after the sum.
    Intended for small Cout (heatmap head: Cout=1)."""
    w_t, bias = wb                               # (Cin, Cout, k, k, k)
    Cin, Cout, k = w_t.shape[0], w_t.shape[1], w_t.shape[2]
    pad = k - 1 - padding                        # equivalent-conv padding
    B, D, H, W, _ = x.shape
    Dp, Hp, Wp = D + 2 * pad, H + 2 * pad, W + 2 * pad
    Do, Ho, Wo = Dp - k + 1, Hp - k + 1, Wp - k + 1

    # cross-correlation weights: flip spatially, reorder to (kd,kh,kw,ci,co)
    w_conv = jnp.flip(w_t, axis=(2, 3, 4)).transpose(2, 3, 4, 0, 1)
    w_conv = w_conv.astype(jnp.float32)

    # W_toe[(w,ci), (kd,kh,wo,co)] = w_conv[kd, kh, w - wo, ci, co] (banded).
    Wt = jnp.zeros((Wp, Cin, k, k, Wo, Cout), jnp.float32)
    wo = jnp.arange(Wo)
    for kw in range(k):
        Wt = Wt.at[wo + kw, :, :, :, wo, :].set(
            jnp.transpose(w_conv[:, :, kw, :, :], (2, 0, 1, 3))[None])

    K = Wp * Cin
    N = k * k * Wo * Cout
    Kp = _round_up(K, _LANE)
    Np = _round_up(N, _LANE)
    wmat = jnp.pad(Wt.reshape(K, N),
                   ((0, Kp - K), (0, Np - N))).astype(jnp.bfloat16)
    zero_shift = jnp.zeros((1, Np), jnp.float32)

    xp = jnp.pad(x.astype(jnp.bfloat16),
                 ((0, 0), (pad, pad), (pad, pad), (pad, pad), (0, 0)))
    Xrows = xp.reshape(B * Dp * Hp, K)
    if Kp != K:
        Xrows = jnp.pad(Xrows, ((0, 0), (0, Kp - K)))

    Y = matmul_bias_act(Xrows, wmat, zero_shift, "none",
                        out_dtype=jnp.bfloat16)
    Y = Y[:, :N].reshape(B, Dp, Hp, k, k, Wo, Cout)

    acc = jnp.zeros((B, Do, Ho, Wo, Cout), jnp.float32)
    for kd in range(k):                          # k^2 shifted-slice sum (f32)
        for kh in range(k):
            acc = acc + Y[:, kd:kd + Do, kh:kh + Ho, kd, kh, :, :].astype(
                jnp.float32)
    y = acc + bias.astype(jnp.float32)
    if act == "relu":
        y = jnp.maximum(y, 0.0)
    elif act == "sigmoid":
        y = jax.nn.sigmoid(y)
    return y.astype(out_dtype)


# ---------------------------------------------------------------------------
# f32 lax references (used only for the unit checks in __main__)
# ---------------------------------------------------------------------------
def _bn_act_ref(y, b, bn, act):
    y = y + b.reshape(1, -1, 1, 1, 1).astype(jnp.float32)
    if bn is not None:
        gamma, beta, rmean, rvar = bn
        y = (y - rmean.reshape(1, -1, 1, 1, 1)) / jnp.sqrt(
            rvar.reshape(1, -1, 1, 1, 1) + BN_EPS)
        y = gamma.reshape(1, -1, 1, 1, 1) * y + beta.reshape(1, -1, 1, 1, 1)
    if act == "relu":
        y = jnp.maximum(y, 0.0)
    elif act == "sigmoid":
        y = jax.nn.sigmoid(y)
    return y


def _ref_conv3d(x_cl, wb, stride, padding, bn=None, act="none"):
    w, b = wb
    x = jnp.transpose(x_cl, (0, 4, 1, 2, 3)).astype(jnp.float32)
    y = lax.conv_general_dilated(
        x, w.astype(jnp.float32), (stride,) * 3, [(padding, padding)] * 3,
        dimension_numbers=("NCDHW", "OIDHW", "NCDHW"))
    return jnp.transpose(_bn_act_ref(y, b, bn, act), (0, 2, 3, 4, 1))


def _ref_conv_transpose3d(x_cl, wb, stride, padding, bn=None, act="none"):
    w_t, b = wb                                  # (Cin, Cout, k, k, k)
    k = w_t.shape[2]
    x = jnp.transpose(x_cl, (0, 4, 1, 2, 3)).astype(jnp.float32)
    w_conv = jnp.flip(w_t, axis=(2, 3, 4)).transpose(1, 0, 2, 3, 4)
    y = lax.conv_general_dilated(
        x, w_conv.astype(jnp.float32), (1, 1, 1),
        [(k - 1 - padding, k - 1 - padding)] * 3, lhs_dilation=(stride,) * 3,
        dimension_numbers=("NCDHW", "OIDHW", "NCDHW"))
    return jnp.transpose(_bn_act_ref(y, b, bn, act), (0, 2, 3, 4, 1))


def _rel_err(got, want):
    got = got.astype(jnp.float32)
    want = want.astype(jnp.float32)
    return float(jnp.max(jnp.abs(got - want)) /
                 (jnp.max(jnp.abs(want)) + 1e-6))


# ---------------------------------------------------------------------------
# Parameter init (deterministic, synthetic)
# ---------------------------------------------------------------------------
def _init_conv(key, cout, cin, k):
    kw, kb = jax.random.split(key)
    fan_in = cin * k * k * k
    w = jax.random.normal(kw, (cout, cin, k, k, k), jnp.float32) / jnp.sqrt(fan_in)
    b = 0.01 * jax.random.normal(kb, (cout,), jnp.float32)
    return w, b


def _init_convT(key, cin, cout, k):
    kw, kb = jax.random.split(key)
    fan_in = cin * k * k * k
    w = jax.random.normal(kw, (cin, cout, k, k, k), jnp.float32) / jnp.sqrt(fan_in)
    b = 0.01 * jax.random.normal(kb, (cout,), jnp.float32)
    return w, b


def _init_bn(key, c):
    k1, k2, k3, k4 = jax.random.split(key, 4)
    gamma = 1.0 + 0.1 * jax.random.normal(k1, (c,), jnp.float32)
    beta = 0.1 * jax.random.normal(k2, (c,), jnp.float32)
    rmean = 0.1 * jax.random.normal(k3, (c,), jnp.float32)
    rvar = jax.random.uniform(k4, (c,), jnp.float32, minval=0.5, maxval=1.5)
    return gamma, beta, rmean, rvar


def init_params(key):
    ks = iter(jax.random.split(key, 32))
    p = {}
    p["conv_scan1"] = _init_conv(next(ks), 24, 1, 8)
    p["conv_scan2"] = _init_conv(next(ks), 32, 24, 4)
    p["conv_scan3"] = _init_conv(next(ks), 40, 32, 4)
    p["conv_scan4"] = _init_conv(next(ks), 64, 40, 4)
    p["conv_cad1"] = _init_conv(next(ks), 4, 1, 4)
    p["conv_cad2"] = _init_conv(next(ks), 6, 4, 4)
    p["conv_cad3"] = _init_conv(next(ks), 8, 6, 4)
    p["bn_scan1"] = _init_bn(next(ks), 24)
    p["bn_scan2"] = _init_bn(next(ks), 32)
    p["bn_scan3"] = _init_bn(next(ks), 40)
    p["bn_scan4"] = _init_bn(next(ks), 64)
    p["bn_cad1"] = _init_bn(next(ks), 4)
    p["bn_cad2"] = _init_bn(next(ks), 6)
    p["bn_cad3"] = _init_bn(next(ks), 8)
    p["feature_conv1"] = _init_conv(next(ks), 40, 72, 3)
    p["feature_conv2"] = _init_conv(next(ks), 40, 40, 3)
    p["feature_bn1"] = _init_bn(next(ks), 40)
    p["feature_bn2"] = _init_bn(next(ks), 40)
    p["scale_conv1"] = _init_conv(next(ks), 16, 40, 3)
    p["scale_conv2"] = _init_conv(next(ks), 3, 16, 4)
    p["match_conv"] = _init_conv(next(ks), 1, 40, 4)
    p["heatmap_conv1"] = _init_convT(next(ks), 40, 32, 4)
    p["heatmap_conv2"] = _init_convT(next(ks), 32, 24, 4)
    p["heatmap_conv3"] = _init_convT(next(ks), 24, 16, 4)
    p["heatmap_conv4"] = _init_convT(next(ks), 16, 1, 5)
    p["heatmap_bn1"] = _init_bn(next(ks), 32)
    p["heatmap_bn2"] = _init_bn(next(ks), 24)
    p["heatmap_bn3"] = _init_bn(next(ks), 16)
    # heatmap_bn4 exists in the PyTorch module but is unused in forward().
    return p


# ---------------------------------------------------------------------------
# Forward pass (matches CorrespondenceModel.forward, eval-mode BN)
# ---------------------------------------------------------------------------
def correspondence_forward(p, scan, cad):
    bs = scan.shape[0]
    # NCDHW -> channels-last (NDHWC) once at the boundary.
    s = jnp.transpose(scan, (0, 2, 3, 4, 1))
    c = jnp.transpose(cad, (0, 2, 3, 4, 1))

    # conv_scan1 (k=8, Cin=1) via the width-Toeplitz fold: no k^3 im2col.
    s = conv3d_toeplitz_w(s, p["conv_scan1"], 2, 4, bn=p["bn_scan1"], act="relu")
    s = conv3d(s, p["conv_scan2"], 2, 2, bn=p["bn_scan2"], act="relu")
    s = conv3d(s, p["conv_scan3"], 2, 2, bn=p["bn_scan3"], act="relu")
    s = conv3d(s, p["conv_scan4"], 2, 1, bn=p["bn_scan4"], act="relu")

    c = conv3d(c, p["conv_cad1"], 2, 2, bn=p["bn_cad1"], act="relu")
    c = conv3d(c, p["conv_cad2"], 2, 2, bn=p["bn_cad2"], act="relu")
    c = conv3d(c, p["conv_cad3"], 2, 1, bn=p["bn_cad3"], act="relu")

    feature = jnp.concatenate([s, c], axis=-1)               # (B,4,4,4,72)
    feature = conv3d(feature, p["feature_conv1"], 1, 1,
                     bn=p["feature_bn1"], act="relu")
    feature = conv3d(feature, p["feature_conv2"], 1, 1,
                     bn=p["feature_bn2"], act="relu")

    scale_feat = conv3d(feature, p["scale_conv1"], 1, 1, act="relu")
    scale_pred = conv3d(scale_feat, p["scale_conv2"], 1, 0,
                        out_dtype=jnp.float32).reshape(bs, 3)

    match_pred = conv3d(feature, p["match_conv"], 1, 0, act="sigmoid",
                        out_dtype=jnp.float32).reshape(bs)

    h = conv_transpose3d_s2(feature, p["heatmap_conv1"],
                            bn=p["heatmap_bn1"], act="relu")
    h = conv_transpose3d_s2(h, p["heatmap_conv2"],
                            bn=p["heatmap_bn2"], act="relu")
    h = conv_transpose3d_s2(h, p["heatmap_conv3"],
                            bn=p["heatmap_bn3"], act="relu")
    heatmap = conv_transpose3d_s1_toeplitz(h, p["heatmap_conv4"], padding=2,
                                           act="sigmoid")    # (B,32,32,32,1)
    heatmap_pred = jnp.transpose(heatmap, (0, 4, 1, 2, 3))   # back to NCDHW
    return match_pred, heatmap_pred, scale_pred


# ---------------------------------------------------------------------------
# Small numeric unit checks against f32 lax.conv references
# ---------------------------------------------------------------------------
def run_unit_checks(key):
    k1, k2, k3, k4, k5 = jax.random.split(key, 5)
    tol = 3e-2   # bf16 inputs/weights, f32 accumulation -> errors are ~1e-3

    # plain-im2col Conv3d + BN + relu
    x = jax.random.normal(k1, (2, 9, 9, 9, 5), jnp.float32)
    wb = _init_conv(k2, 7, 5, 3)
    bn = _init_bn(k3, 7)
    got = conv3d(x, wb, 2, 1, bn=bn, act="relu", out_dtype=jnp.float32)
    want = _ref_conv3d(x, wb, 2, 1, bn=bn, act="relu")
    assert got.shape == want.shape and _rel_err(got, want) < tol

    # width-Toeplitz Conv3d (conv_scan1 form: Cin=1, k=8, s=2, p=4)
    x = jax.random.normal(k1, (1, 18, 18, 18, 1), jnp.float32)
    wb = _init_conv(k4, 6, 1, 8)
    got = conv3d_toeplitz_w(x, wb, 2, 4, act="relu", out_dtype=jnp.float32)
    want = _ref_conv3d(x, wb, 2, 4, act="relu")
    assert got.shape == want.shape and _rel_err(got, want) < tol

    # sub-pixel ConvTranspose3d (k=4, s=2, p=1) + BN + relu
    x = jax.random.normal(k2, (1, 5, 5, 5, 6), jnp.float32)
    wb = _init_convT(k5, 6, 4, 4)
    bn = _init_bn(k3, 4)
    got = conv_transpose3d_s2(x, wb, bn=bn, act="relu")
    want = _ref_conv_transpose3d(x, wb, 2, 1, bn=bn, act="relu")
    assert got.shape == want.shape and _rel_err(got, want) < tol

    # width-Toeplitz ConvTranspose3d (k=5, s=1, p=2) + sigmoid
    x = jax.random.normal(k3, (1, 10, 10, 10, 6), jnp.float32)
    wb = _init_convT(k4, 6, 2, 5)
    got = conv_transpose3d_s1_toeplitz(x, wb, padding=2, act="sigmoid")
    want = _ref_conv_transpose3d(x, wb, 1, 2, act="sigmoid")
    assert got.shape == want.shape and _rel_err(got, want) < tol


if __name__ == "__main__":
    key = jax.random.PRNGKey(0)
    k_scan, k_cad, k_params, k_check = jax.random.split(key, 4)

    run_unit_checks(k_check)

    # Smallest spatial sizes that satisfy the architecture's reshape to
    # (bs, 3) / (bs,): scan 50^3 -> feature 4^3, cad 26^3 -> 4^3.
    scan = jax.random.normal(k_scan, (2, 1, 50, 50, 50), jnp.float32)
    cad = jax.random.normal(k_cad, (2, 1, 26, 26, 26), jnp.float32)
    params = init_params(k_params)

    fwd = jax.jit(correspondence_forward)
    match_pred, heatmap_pred, scale_pred = fwd(params, scan, cad)
    jax.block_until_ready((match_pred, heatmap_pred, scale_pred))

    assert match_pred.shape == (2,)
    assert heatmap_pred.shape == (2, 1, 32, 32, 32)
    assert scale_pred.shape == (2, 3)
    assert bool(jnp.all(jnp.isfinite(match_pred)))
    assert bool(jnp.all(jnp.isfinite(heatmap_pred)))
    assert bool(jnp.all(jnp.isfinite(scale_pred)))
    print("KERNEL_OK")
</pallas_src>

<mosaic_0001>
module attributes {stable_mosaic.version = 11 : i64} {
  func.func @_mm_bias_act_kernel(%arg0: i32, %arg1: memref<256x256xbf16, #tpu.memory_space<vmem>>, %arg2: memref<256x128xbf16, #tpu.memory_space<vmem>>, %arg3: memref<1x128xf32, #tpu.memory_space<vmem>>, %arg4: memref<256x128xf32, #tpu.memory_space<vmem>>) attributes {dimension_semantics = [#tpu.dimension_semantics<parallel>], iteration_bounds = array<i64: 1>, scalar_prefetch = 0 : i64, scratch_operands = 0 : i64, tpu.core_type = #tpu.core_type<tc>, window_params = [{transform_indices = @transform_0, window_bounds = array<i64: 256, 256>}, {pipeline_mode = #tpu.pipeline_mode<synchronous>, transform_indices = @transform_1, window_bounds = array<i64: 256, 128>}, {pipeline_mode = #tpu.pipeline_mode<synchronous>, transform_indices = @transform_2, window_bounds = array<i64: 1, 128>}, {transform_indices = @transform_3, window_bounds = array<i64: 256, 128>}]} {
    %c0 = arith.constant 0 : index
    %c0_0 = arith.constant 0 : index
    %0 = vector.load %arg1[%c0, %c0_0] : memref<256x256xbf16, #tpu.memory_space<vmem>>, vector<256x256xbf16>
    %c0_1 = arith.constant 0 : index
    %c0_2 = arith.constant 0 : index
    %1 = vector.load %arg2[%c0_1, %c0_2] : memref<256x128xbf16, #tpu.memory_space<vmem>>, vector<256x128xbf16>
    %cst = arith.constant dense<0.000000e+00> : vector<256x128xf32>
    %2 = tpu.matmul %0, %1, %cst {dimension_numbers = #tpu.dot_dimension_numbers<[1], [0], [0], [1], [0, 0, 1, 1], [], []>} : vector<256x256xbf16>, vector<256x128xbf16>, vector<256x128xf32> -> vector<256x128xf32>
    %c0_3 = arith.constant 0 : index
    %c0_4 = arith.constant 0 : index
    %3 = vector.load %arg3[%c0_3, %c0_4] : memref<1x128xf32, #tpu.memory_space<vmem>>, vector<1x128xf32>
    %4 = vector.broadcast %3 : vector<1x128xf32> to vector<256x128xf32>
    %5 = arith.addf %2, %4 : vector<256x128xf32>
    %cst_5 = arith.constant 0.000000e+00 : f32
    %6 = vector.broadcast %cst_5 : f32 to vector<256x128xf32>
    %7 = arith.maximumf %5, %6 : vector<256x128xf32>
    %c0_6 = arith.constant 0 : index
    %c0_7 = arith.constant 0 : index
    %8 = vector.load %arg4[%c0_6, %c0_7] : memref<256x128xf32, #tpu.memory_space<vmem>>, vector<256x128xf32>
    tpu.vector_store %arg4[%c0_6, %c0_7], %7 {strides = array<i32>} : memref<256x128xf32, #tpu.memory_space<vmem>>, vector<256x128xf32>,
    return
  }
  func.func @transform_0(%arg0: i32) -> (i32, i32) {
    %c0_i32 = arith.constant 0 : i32
    %c0_i32_0 = arith.constant 0 : i32
    return %arg0, %c0_i32 : i32, i32
  }
  func.func @transform_1(%arg0: i32) -> (i32, i32) {
    %c0_i32 = arith.constant 0 : i32
    %c0_i32_0 = arith.constant 0 : i32
    %c0_i32_1 = arith.constant 0 : i32
    return %c0_i32, %c0_i32_0 : i32, i32
  }
  func.func @transform_2(%arg0: i32) -> (i32, i32) {
    %c0_i32 = arith.constant 0 : i32
    %c0_i32_0 = arith.constant 0 : i32
    %c0_i32_1 = arith.constant 0 : i32
    return %c0_i32, %c0_i32_0 : i32, i32
  }
  func.func @transform_3(%arg0: i32) -> (i32, i32) {
    %c0_i32 = arith.constant 0 : i32
    %c0_i32_0 = arith.constant 0 : i32
    return %arg0, %c0_i32 : i32, i32
  }
}

</mosaic_0001>

<llo_original>
// kernel: tpu_custom_call.1
$region0: #{tpu_custom_call.1}
  #allocation0 [shape = 'u32[]', space=smem, size = 0x4, offset = 0x4, fixed_abs, tag = 'smem constant byte address 0x4 - core index']
  #allocation1 [shape = 'u32[144,128]{1,0:T(1,128)}', space=vmem, size = 0x12000, scoped, tag = 'internal scratch']
  %s0 = inlined_call_operand.hbm [shape: bf16[256,256], index: 0, kind: input, shape index: {}]
  %s1 = inlined_call_operand.hbm [shape: bf16[256,128], index: 1, kind: input, shape index: {}]
  %s2 = inlined_call_operand.vmem [shape: f32[1,128], index: 2, kind: input, shape index: {}]
  %s3 = inlined_call_operand.hbm [shape: f32[256,128], index: 3, kind: output, shape index: {}]
  %s4 = sld [smem:[#allocation0]]
  $region30: #{tpu_custom_call.1} parent=0
    _
  %s6 = ssub.s32 1, %s4
  %s7 = scalar_select 0, %s6, %s4
  $region1: #{tpu_custom_call.1} parent=0
    #allocation2 [shape = 'u8[131072]{0}', space=vmem, size = 0x20000, scoped, tag = 'input window, operand 0, single buffered']
    #allocation3 [shape = 's32[1]{0}', space=sflag, size = 0x4, scoped, tag = 'scoped memory for tpu_custom_call.1']
    #allocation4 [shape = 's32[1]{0}', space=sflag, size = 0x4, scoped, tag = 'scoped memory for tpu_custom_call.1']
    #allocation5 [shape = 'u8[65536]{0}', space=vmem, size = 0x10000, scoped, tag = 'input window, operand 1, single buffered']
    #allocation6 [shape = 's32[1]{0}', space=sflag, size = 0x4, scoped, tag = 'scoped memory for tpu_custom_call.1']
    #allocation7 [shape = 'u8[131072]{0}', space=vmem, size = 0x20000, scoped, tag = 'output window, operand 0, single buffered']
    %8 = vsyncpa [#allocation3], 0
    %9 = vsyncpa [#allocation6], 0
    %10 = vsyncpa [#allocation4], 0
    // Predicated region
    $region2: #{tpu_custom_call.1} parent=1 // pred_check
      _
    $region3: #{tpu_custom_call.1} parent=1 // pred_check_branch
      %12 = sbr.rel (0) target = $region5
    $region4: #{tpu_custom_call.1} parent=1 // pred_region
      %s14 = ssub.s32 4096, 4096
      %15 = vsyncadd [#allocation3], %s14
      %s16 = sshll.u32 [#allocation2], 4
      %s17 = int_to_ptr.vmem [resolvable:$true] %s16
      %22 = dma.hbm_to_vmem [thread:$0]  %s0, 4096, %s17, [#allocation3], 128, 128, 8
    $region5: #{tpu_custom_call.1} parent=1 // pred_fallthru
      _
    // Predicated region
    $region6: #{tpu_custom_call.1} parent=1 // pred_check
      _
    $region7: #{tpu_custom_call.1} parent=1 // pred_check_branch
      %24 = sbr.rel (0) target = $region9
    $region8: #{tpu_custom_call.1} parent=1 // pred_region
      %s26 = ssub.s32 2048, 2048
      %27 = vsyncadd [#allocation6], %s26
      %s28 = sshll.u32 [#allocation5], 4
      %s29 = int_to_ptr.vmem [resolvable:$true] %s28
      %34 = dma.hbm_to_vmem [thread:$0]  %s1, 2048, %s29, [#allocation6], 64, 64, 4
    $region9: #{tpu_custom_call.1} parent=1 // pred_fallthru
      _
    // Predicated region
    $region10: #{tpu_custom_call.1} parent=1 // pred_check
      _
    $region11: #{tpu_custom_call.1} parent=1 // pred_check_branch
      %36 = sbr.rel (0) target = $region13
    $region12: #{tpu_custom_call.1} parent=1 // pred_region
      _
    $region13: #{tpu_custom_call.1} parent=1 // pred_fallthru
      _
    // Predicated region
    $region14: #{tpu_custom_call.1} parent=1 // pred_check
      _
    $region15: #{tpu_custom_call.1} parent=1 // pred_check_branch
      %38 = sbr.rel (0) target = $region17
    $region16: #{tpu_custom_call.1} parent=1 // pred_region
      %39 = dma.done [#allocation3], 4096
    $region17: #{tpu_custom_call.1} parent=1 // pred_fallthru
      _
    // Predicated region
    $region18: #{tpu_custom_call.1} parent=1 // pred_check
      _
    $region19: #{tpu_custom_call.1} parent=1 // pred_check_branch
      %41 = sbr.rel (0) target = $region21
    $region20: #{tpu_custom_call.1} parent=1 // pred_region
      %42 = dma.done [#allocation6], 2048
    $region21: #{tpu_custom_call.1} parent=1 // pred_fallthru
      _
    %v44 = vld [vmem:[#allocation2] sm:$0xff]
    %v45 = vld [vmem:[#allocation2 + $0x8] sm:$0xff]
    %v46 = vld [vmem:[#allocation2 + $0x10] sm:$0xff]
    %v47 = vld [vmem:[#allocation2 + $0x18] sm:$0xff]
    %v48 = vld [vmem:[#allocation2 + $0x20] sm:$0xff]
    %v49 = vld [vmem:[#allocation2 + $0x28] sm:$0xff]
    %v50 = vld [vmem:[#allocation2 + $0x30] sm:$0xff]
    %v51 = vld [vmem:[#allocation2 + $0x38] sm:$0xff]
    %v52 = vld [vmem:[#allocation2 + $0x40] sm:$0xff]
    %v53 = vld [vmem:[#allocation2 + $0x48] sm:$0xff]
    %v54 = vld [vmem:[#allocation2 + $0x50] sm:$0xff]
    %v55 = vld [vmem:[#allocation2 + $0x58] sm:$0xff]
    %v56 = vld [vmem:[#allocation2 + $0x60] sm:$0xff]
    %v57 = vld [vmem:[#allocation2 + $0x68] sm:$0xff]
    %v58 = vld [vmem:[#allocation2 + $0x70] sm:$0xff]
    %v59 = vld [vmem:[#allocation2 + $0x78] sm:$0xff]
    %v60 = vld [vmem:[#allocation2 + $0x80] sm:$0xff]
    %v61 = vld [vmem:[#allocation2 + $0x88] sm:$0xff]
    %v62 = vld [vmem:[#allocation2 + $0x90] sm:$0xff]
    %v63 = vld [vmem:[#allocation2 + $0x98] sm:$0xff]
    %v64 = vld [vmem:[#allocation2 + $0xa0] sm:$0xff]
    %v65 = vld [vmem:[#allocation2 + $0xa8] sm:$0xff]
    %v66 = vld [vmem:[#allocation2 + $0xb0] sm:$0xff]
    %v67 = vld [vmem:[#allocation2 + $0xb8] sm:$0xff]
    %v68 = vld [vmem:[#allocation2 + $0xc0] sm:$0xff]
    %v69 = vld [vmem:[#allocation2 + $0xc8] sm:$0xff]
    %v70 = vld [vmem:[#allocation2 + $0xd0] sm:$0xff]
    %v71 = vld [vmem:[#allocation2 + $0xd8] sm:$0xff]
    %v72 = vld [vmem:[#allocation2 + $0xe0] sm:$0xff]
    %v73 = vld [vmem:[#allocation2 + $0xe8] sm:$0xff]
    %v74 = vld [vmem:[#allocation2 + $0xf0] sm:$0xff]
    %v75 = vld [vmem:[#allocation2 + $0xf8] sm:$0xff]
    %v76 = vld [vmem:[#allocation5] sm:$0xf]
    %v77 = vld [vmem:[#allocation5 + $0x4] sm:$0xf]
    %v78 = vld [vmem:[#allocation5 + $0x8] sm:$0xf]
    %v79 = vld [vmem:[#allocation5 + $0xc] sm:$0xf]
    %v80 = vld [vmem:[#allocation5 + $0x10] sm:$0xf]
    %v81 = vld [vmem:[#allocation5 + $0x14] sm:$0xf]
    %v82 = vld [vmem:[#allocation5 + $0x18] sm:$0xf]
    %v83 = vld [vmem:[#allocation5 + $0x1c] sm:$0xf]
    %v84 = vld [vmem:[#allocation5 + $0x20] sm:$0xf]
    %v85 = vld [vmem:[#allocation5 + $0x24] sm:$0xf]
    %v86 = vld [vmem:[#allocation5 + $0x28] sm:$0xf]
    %v87 = vld [vmem:[#allocation5 + $0x2c] sm:$0xf]
    %v88 = vld [vmem:[#allocation5 + $0x30] sm:$0xf]
    %v89 = vld [vmem:[#allocation5 + $0x34] sm:$0xf]
    %v90 = vld [vmem:[#allocation5 + $0x38] sm:$0xf]
    %v91 = vld [vmem:[#allocation5 + $0x3c] sm:$0xf]
    %v92 = vld [vmem:[#allocation5 + $0x40] sm:$0xf]
    %v93 = vld [vmem:[#allocation5 + $0x44] sm:$0xf]
    %v94 = vld [vmem:[#allocation5 + $0x48] sm:$0xf]
    %v95 = vld [vmem:[#allocation5 + $0x4c] sm:$0xf]
    %v96 = vld [vmem:[#allocation5 + $0x50] sm:$0xf]
    %v97 = vld [vmem:[#allocation5 + $0x54] sm:$0xf]
    %v98 = vld [vmem:[#allocation5 + $0x58] sm:$0xf]
    %v99 = vld [vmem:[#allocation5 + $0x5c] sm:$0xf]
    %v100 = vld [vmem:[#allocation5 + $0x60] sm:$0xf]
    %v101 = vld [vmem:[#allocation5 + $0x64] sm:$0xf]
    %v102 = vld [vmem:[#allocation5 + $0x68] sm:$0xf]
    %v103 = vld [vmem:[#allocation5 + $0x6c] sm:$0xf]
    %v104 = vld [vmem:[#allocation5 + $0x70] sm:$0xf]
    %v105 = vld [vmem:[#allocation5 + $0x74] sm:$0xf]
    %v106 = vld [vmem:[#allocation5 + $0x78] sm:$0xf]
    %v107 = vld [vmem:[#allocation5 + $0x7c] sm:$0xf]
    %v108 = vld [vmem:[%s2] sm:$0x1]
    %v110 = vlaneseq
    %v111 = vshrl.u32 %v110, 7
    %v112 = vsub.s32 0, %v111
    %v113 = vrot.slane %v108, %v112
    %v147 = vunpack.c.l.b16 %v44
    %v148 = vunpack.c.h.b16 %v44
    %v149 = vunpack.c.l.b16 %v45
    %v150 = vunpack.c.h.b16 %v45
    %v151 = vunpack.c.l.b16 %v46
    %v152 = vunpack.c.h.b16 %v46
    %v153 = vunpack.c.l.b16 %v47
    %v154 = vunpack.c.h.b16 %v47
    %v155 = vunpack.c.l.b16 %v48
    %v156 = vunpack.c.h.b16 %v48
    %v157 = vunpack.c.l.b16 %v49
    %v158 = vunpack.c.h.b16 %v49
    %v159 = vunpack.c.l.b16 %v50
    %v160 = vunpack.c.h.b16 %v50
    %v161 = vunpack.c.l.b16 %v51
    %v162 = vunpack.c.h.b16 %v51
    %v163 = vunpack.c.l.b16 %v52
    %v164 = vunpack.c.h.b16 %v52
    %v165 = vunpack.c.l.b16 %v53
    %v166 = vunpack.c.h.b16 %v53
    %v167 = vunpack.c.l.b16 %v54
    %v168 = vunpack.c.h.b16 %v54
    %v169 = vunpack.c.l.b16 %v55
    %v170 = vunpack.c.h.b16 %v55
    %v171 = vunpack.c.l.b16 %v56
    %v172 = vunpack.c.h.b16 %v56
    %v173 = vunpack.c.l.b16 %v57
    %v174 = vunpack.c.h.b16 %v57
    %v175 = vunpack.c.l.b16 %v58
    %v176 = vunpack.c.h.b16 %v58
    %v177 = vunpack.c.l.b16 %v59
    %v178 = vunpack.c.h.b16 %v59
    %v179 = vunpack.c.l.b16 %v60
    %v180 = vunpack.c.h.b16 %v60
    %v181 = vunpack.c.l.b16 %v61
    %v182 = vunpack.c.h.b16 %v61
    %v183 = vunpack.c.l.b16 %v62
    %v184 = vunpack.c.h.b16 %v62
    %v185 = vunpack.c.l.b16 %v63
    %v186 = vunpack.c.h.b16 %v63
    %v187 = vunpack.c.l.b16 %v64
    %v188 = vunpack.c.h.b16 %v64
    %v189 = vunpack.c.l.b16 %v65
    %v190 = vunpack.c.h.b16 %v65
    %v191 = vunpack.c.l.b16 %v66
    %v192 = vunpack.c.h.b16 %v66
    %v193 = vunpack.c.l.b16 %v67
    %v194 = vunpack.c.h.b16 %v67
    %v195 = vunpack.c.l.b16 %v68
    %v196 = vunpack.c.h.b16 %v68
    %v197 = vunpack.c.l.b16 %v69
    %v198 = vunpack.c.h.b16 %v69
    %v199 = vunpack.c.l.b16 %v70
    %v200 = vunpack.c.h.b16 %v70
    %v201 = vunpack.c.l.b16 %v71
    %v202 = vunpack.c.h.b16 %v71
    %v203 = vunpack.c.l.b16 %v72
    %v204 = vunpack.c.h.b16 %v72
    %v205 = vunpack.c.l.b16 %v73
    %v206 = vunpack.c.h.b16 %v73
    %v207 = vunpack.c.l.b16 %v74
    %v208 = vunpack.c.h.b16 %v74
    %v209 = vunpack.c.l.b16 %v75
    %v210 = vunpack.c.h.b16 %v75
    %v211 = vpack.c.b16 %v149, %v147
    %v212 = vpack.c.b16 %v150, %v148
    %v213 = vpack.c.b16 %v153, %v151
    %v214 = vpack.c.b16 %v154, %v152
    %v215 = vpack.c.b16 %v157, %v155
    %v216 = vpack.c.b16 %v158, %v156
    %v217 = vpack.c.b16 %v161, %v159
    %v218 = vpack.c.b16 %v162, %v160
    %v219 = vpack.c.b16 %v165, %v163
    %v220 = vpack.c.b16 %v166, %v164
    %v221 = vpack.c.b16 %v169, %v167
    %v222 = vpack.c.b16 %v170, %v168
    %v223 = vpack.c.b16 %v173, %v171
    %v224 = vpack.c.b16 %v174, %v172
    %v225 = vpack.c.b16 %v177, %v175
    %v226 = vpack.c.b16 %v178, %v176
    %v227 = vpack.c.b16 %v181, %v179
    %v228 = vpack.c.b16 %v182, %v180
    %v229 = vpack.c.b16 %v185, %v183
    %v230 = vpack.c.b16 %v186, %v184
    %v231 = vpack.c.b16 %v189, %v187
    %v232 = vpack.c.b16 %v190, %v188
    %v233 = vpack.c.b16 %v193, %v191
    %v234 = vpack.c.b16 %v194, %v192
    %v235 = vpack.c.b16 %v197, %v195
    %v236 = vpack.c.b16 %v198, %v196
    %v237 = vpack.c.b16 %v201, %v199
    %v238 = vpack.c.b16 %v202, %v200
    %v239 = vpack.c.b16 %v205, %v203
    %v240 = vpack.c.b16 %v206, %v204
    %v241 = vpack.c.b16 %v209, %v207
    %v242 = vpack.c.b16 %v210, %v208
    %v307 = vunpack.c.l.b16 %v76
    %v308 = vunpack.c.l.b16 %v77
    %v309 = vunpack.c.l.b16 %v78
    %v310 = vunpack.c.l.b16 %v79
    %v311 = vunpack.c.l.b16 %v80
    %v312 = vunpack.c.l.b16 %v81
    %v313 = vunpack.c.l.b16 %v82
    %v314 = vunpack.c.l.b16 %v83
    %v315 = vunpack.c.l.b16 %v84
    %v316 = vunpack.c.l.b16 %v85
    %v317 = vunpack.c.l.b16 %v86
    %v318 = vunpack.c.l.b16 %v87
    %v319 = vunpack.c.l.b16 %v88
    %v320 = vunpack.c.l.b16 %v89
    %v321 = vunpack.c.l.b16 %v90
    %v322 = vunpack.c.l.b16 %v91
    %v323 = vunpack.c.l.b16 %v92
    %v324 = vunpack.c.l.b16 %v93
    %v325 = vunpack.c.l.b16 %v94
    %v326 = vunpack.c.l.b16 %v95
    %v327 = vunpack.c.l.b16 %v96
    %v328 = vunpack.c.l.b16 %v97
    %v329 = vunpack.c.l.b16 %v98
    %v330 = vunpack.c.l.b16 %v99
    %v331 = vunpack.c.l.b16 %v100
    %v332 = vunpack.c.l.b16 %v101
    %v333 = vunpack.c.l.b16 %v102
    %v334 = vunpack.c.l.b16 %v103
    %v335 = vunpack.c.l.b16 %v104
    %v336 = vunpack.c.l.b16 %v105
    %v337 = vunpack.c.l.b16 %v106
    %v338 = vunpack.c.l.b16 %v107
    %v339 = vpack.c.b16 %v308, %v307
    %v340 = vpack.c.b16 %v310, %v309
    %v341 = vpack.c.b16 %v312, %v311
    %v342 = vpack.c.b16 %v314, %v313
    %v343 = vpack.c.b16 %v316, %v315
    %v344 = vpack.c.b16 %v318, %v317
    %v345 = vpack.c.b16 %v320, %v319
    %v346 = vpack.c.b16 %v322, %v321
    %v347 = vpack.c.b16 %v324, %v323
    %v348 = vpack.c.b16 %v326, %v325
    %v349 = vpack.c.b16 %v328, %v327
    %v350 = vpack.c.b16 %v330, %v329
    %v351 = vpack.c.b16 %v332, %v331
    %v352 = vpack.c.b16 %v334, %v333
    %v353 = vpack.c.b16 %v336, %v335
    %v354 = vpack.c.b16 %v338, %v337
    %371 = vmatprep.subr.bf16.mxu0 0
    %372 = vmatpush1.bf16.msra.mxu0 %v339
    %373 = vmatprep.subr.bf16.mxu0 0
    %374 = vmatpush1.bf16.msra.mxu0 %v340
    %375 = vmatprep.subr.bf16.mxu0 0
    %376 = vmatpush1.bf16.msra.mxu0 %v341
    %377 = vmatprep.subr.bf16.mxu0 0
    %378 = vmatpush1.bf16.msra.mxu0 %v342
    %379 = vmatprep.subr.bf16.mxu0 0
    %380 = vmatpush1.bf16.msra.mxu0 %v343
    %381 = vmatprep.subr.bf16.mxu0 0
    %382 = vmatpush1.bf16.msra.mxu0 %v344
    %383 = vmatprep.subr.bf16.mxu0 0
    %384 = vmatpush1.bf16.msra.mxu0 %v345
    %385 = vmatprep.subr.bf16.mxu0 0
    %386 = vmatpush1.bf16.msra.mxu0 %v346
    %387 = vmatprep.subr.bf16.mxu0 0
    %388 = vmatpush1.bf16.msra.mxu0 %v347
    %389 = vmatprep.subr.bf16.mxu0 0
    %390 = vmatpush1.bf16.msra.mxu0 %v348
    %391 = vmatprep.subr.bf16.mxu0 0
    %392 = vmatpush1.bf16.msra.mxu0 %v349
    %393 = vmatprep.subr.bf16.mxu0 0
    %394 = vmatpush1.bf16.msra.mxu0 %v350
    %395 = vmatprep.subr.bf16.mxu0 0
    %396 = vmatpush1.bf16.msra.mxu0 %v351
    %397 = vmatprep.subr.bf16.mxu0 0
    %398 = vmatpush1.bf16.msra.mxu0 %v352
    %399 = vmatprep.subr.bf16.mxu0 0
    %400 = vmatpush1.bf16.msra.mxu0 %v353
    %401 = vmatprep.subr.bf16.mxu0 0
    %402 = vmatpush1.bf16.msra.mxu0 %v354
    %403 = vmatprep.mubr.bf16.mxu0 %v212
    %404 = vmatmul.mubr.bf16.gmra.mrb[0].mxu0 %v211
    %v405 = vpop.f32.mrb[0].mxu0
    %v406 = vadd.f32 %v113, %v405
    %v407 = vpop.f32.mrb[0].mxu0
    %v408 = vpop.f32.mrb[0].mxu0
    %v409 = vadd.f32 %v113, %v408
    %v410 = vpop.f32.mrb[0].mxu0
    %411 = vmatprep.mubr.bf16.mxu0 %v214
    %412 = vmatmul.mubr.bf16.gmra.mrb[0].mxu0 %v213
    %v413 = vpop.f32.mrb[0].mxu0
    %v414 = vadd.f32 %v113, %v413
    %v415 = vpop.f32.mrb[0].mxu0
    %v416 = vpop.f32.mrb[0].mxu0
    %v417 = vadd.f32 %v113, %v416
    %v418 = vpop.f32.mrb[0].mxu0
    %419 = vmatprep.mubr.bf16.mxu0 %v216
    %420 = vmatmul.mubr.bf16.gmra.mrb[0].mxu0 %v215
    %v421 = vpop.f32.mrb[0].mxu0
    %v422 = vadd.f32 %v113, %v421
    %v423 = vpop.f32.mrb[0].mxu0
    %v424 = vpop.f32.mrb[0].mxu0
    %v425 = vadd.f32 %v113, %v424
    %v426 = vpop.f32.mrb[0].mxu0
    %427 = vmatprep.mubr.bf16.mxu0 %v218
    %428 = vmatmul.mubr.bf16.gmra.mrb[0].mxu0 %v217
    %v429 = vpop.f32.mrb[0].mxu0
    %v430 = vadd.f32 %v113, %v429
    %v431 = vpop.f32.mrb[0].mxu0
    %v432 = vpop.f32.mrb[0].mxu0
    %v433 = vadd.f32 %v113, %v432
    %v434 = vpop.f32.mrb[0].mxu0
    %435 = vmatprep.mubr.bf16.mxu0 %v220
    %436 = vmatmul.mubr.bf16.gmra.mrb[0].mxu0 %v219
    %v437 = vpop.f32.mrb[0].mxu0
    %v438 = vadd.f32 %v113, %v437
    %v439 = vpop.f32.mrb[0].mxu0
    %v440 = vpop.f32.mrb[0].mxu0
    %v441 = vadd.f32 %v113, %v440
    %v442 = vpop.f32.mrb[0].mxu0
    %443 = vmatprep.mubr.bf16.mxu0 %v222
    %444 = vmatmul.mubr.bf16.gmra.mrb[0].mxu0 %v221
    %v445 = vpop.f32.mrb[0].mxu0
    %v446 = vadd.f32 %v113, %v445
    %v447 = vpop.f32.mrb[0].mxu0
    %v448 = vpop.f32.mrb[0].mxu0
    %v449 = vadd.f32 %v113, %v448
    %v450 = vpop.f32.mrb[0].mxu0
    %451 = vmatprep.mubr.bf16.mxu0 %v224
    %452 = vmatmul.mubr.bf16.gmra.mrb[0].mxu0 %v223
    %v453 = vpop.f32.mrb[0].mxu0
    %v454 = vadd.f32 %v113, %v453
    %v455 = vpop.f32.mrb[0].mxu0
    %v456 = vpop.f32.mrb[0].mxu0
    %v457 = vadd.f32 %v113, %v456
    %v458 = vpop.f32.mrb[0].mxu0
    %459 = vmatprep.mubr.bf16.mxu0 %v226
    %460 = vmatmul.mubr.bf16.gmra.mrb[0].mxu0 %v225
    %v461 = vpop.f32.mrb[0].mxu0
    %v462 = vadd.f32 %v113, %v461
    %v463 = vpop.f32.mrb[0].mxu0
    %v464 = vpop.f32.mrb[0].mxu0
    %v465 = vadd.f32 %v113, %v464
    %v466 = vpop.f32.mrb[0].mxu0
    %467 = vmatprep.mubr.bf16.mxu0 %v228
    %468 = vmatmul.mubr.bf16.gmra.mrb[0].mxu0 %v227
    %v469 = vpop.f32.mrb[0].mxu0
    %v470 = vadd.f32 %v113, %v469
    %v471 = vpop.f32.mrb[0].mxu0
    %v472 = vpop.f32.mrb[0].mxu0
    %v473 = vadd.f32 %v113, %v472
    %v474 = vpop.f32.mrb[0].mxu0
    %475 = vmatprep.mubr.bf16.mxu0 %v230
    %476 = vmatmul.mubr.bf16.gmra.mrb[0].mxu0 %v229
    %v477 = vpop.f32.mrb[0].mxu0
    %v478 = vadd.f32 %v113, %v477
    %v479 = vpop.f32.mrb[0].mxu0
    %v480 = vpop.f32.mrb[0].mxu0
    %v481 = vadd.f32 %v113, %v480
    %v482 = vpop.f32.mrb[0].mxu0
    %483 = vmatprep.mubr.bf16.mxu0 %v232
    %484 = vmatmul.mubr.bf16.gmra.mrb[0].mxu0 %v231
    %v485 = vpop.f32.mrb[0].mxu0
    %v486 = vadd.f32 %v113, %v485
    %v487 = vpop.f32.mrb[0].mxu0
    %v488 = vpop.f32.mrb[0].mxu0
    %v489 = vadd.f32 %v113, %v488
    %v490 = vpop.f32.mrb[0].mxu0
    %491 = vmatprep.mubr.bf16.mxu0 %v234
    %492 = vmatmul.mubr.bf16.gmra.mrb[0].mxu0 %v233
    %v493 = vpop.f32.mrb[0].mxu0
    %v494 = vadd.f32 %v113, %v493
    %v495 = vpop.f32.mrb[0].mxu0
    %v496 = vpop.f32.mrb[0].mxu0
    %v497 = vadd.f32 %v113, %v496
    %v498 = vpop.f32.mrb[0].mxu0
    %499 = vmatprep.mubr.bf16.mxu0 %v236
    %500 = vmatmul.mubr.bf16.gmra.mrb[0].mxu0 %v235
    %v501 = vpop.f32.mrb[0].mxu0
    %v502 = vadd.f32 %v113, %v501
    %v503 = vpop.f32.mrb[0].mxu0
    %v504 = vpop.f32.mrb[0].mxu0
    %v505 = vadd.f32 %v113, %v504
    %v506 = vpop.f32.mrb[0].mxu0
    %507 = vmatprep.mubr.bf16.mxu0 %v238
    %508 = vmatmul.mubr.bf16.gmra.mrb[0].mxu0 %v237
    %v509 = vpop.f32.mrb[0].mxu0
    %v510 = vadd.f32 %v113, %v509
    %v511 = vpop.f32.mrb[0].mxu0
    %v512 = vpop.f32.mrb[0].mxu0
    %v513 = vadd.f32 %v113, %v512
    %v514 = vpop.f32.mrb[0].mxu0
    %515 = vmatprep.mubr.bf16.mxu0 %v240
    %516 = vmatmul.mubr.bf16.gmra.mrb[0].mxu0 %v239
    %v517 = vpop.f32.mrb[0].mxu0
    %v518 = vadd.f32 %v113, %v517
    %v519 = vpop.f32.mrb[0].mxu0
    %v520 = vpop.f32.mrb[0].mxu0
    %v521 = vadd.f32 %v113, %v520
    %v522 = vpop.f32.mrb[0].mxu0
    %523 = vmatprep.mubr.bf16.mxu0 %v242
    %524 = vmatmul.mubr.bf16.gmra.mrb[0].mxu0 %v241
    %v525 = vpop.f32.mrb[0].mxu0
    %v526 = vadd.f32 %v113, %v525
    %v527 = vpop.f32.mrb[0].mxu0
    %v528 = vpop.f32.mrb[0].mxu0
    %v529 = vadd.f32 %v113, %v528
    %v530 = vpop.f32.mrb[0].mxu0
    %531 = vdwg.mxu0
    %v532 = vmax.f32 %v406, 0.0
    %v533 = vmax.f32 %v409, 0.0
    %v534 = vmax.f32 %v414, 0.0
    %v535 = vmax.f32 %v417, 0.0
    %v536 = vmax.f32 %v422, 0.0
    %v537 = vmax.f32 %v425, 0.0
    %v538 = vmax.f32 %v430, 0.0
    %v539 = vmax.f32 %v433, 0.0
    %v540 = vmax.f32 %v438, 0.0
    %v541 = vmax.f32 %v441, 0.0
    %v542 = vmax.f32 %v446, 0.0
    %v543 = vmax.f32 %v449, 0.0
    %v544 = vmax.f32 %v454, 0.0
    %v545 = vmax.f32 %v457, 0.0
    %v546 = vmax.f32 %v462, 0.0
    %v547 = vmax.f32 %v465, 0.0
    %v548 = vmax.f32 %v470, 0.0
    %v549 = vmax.f32 %v473, 0.0
    %v550 = vmax.f32 %v478, 0.0
    %v551 = vmax.f32 %v481, 0.0
    %v552 = vmax.f32 %v486, 0.0
    %v553 = vmax.f32 %v489, 0.0
    %v554 = vmax.f32 %v494, 0.0
    %v555 = vmax.f32 %v497, 0.0
    %v556 = vmax.f32 %v502, 0.0
    %v557 = vmax.f32 %v505, 0.0
    %v558 = vmax.f32 %v510, 0.0
    %v559 = vmax.f32 %v513, 0.0
    %v560 = vmax.f32 %v518, 0.0
    %v561 = vmax.f32 %v521, 0.0
    %v562 = vmax.f32 %v526, 0.0
    %v563 = vmax.f32 %v529, 0.0
    %564 = vst [vmem:[#allocation7] sm:$0xff] %v532
    %565 = vst [vmem:[#allocation7 + $0x8] sm:$0xff] %v533
    %566 = vst [vmem:[#allocation7 + $0x10] sm:$0xff] %v534
    %567 = vst [vmem:[#allocation7 + $0x18] sm:$0xff] %v535
    %568 = vst [vmem:[#allocation7 + $0x20] sm:$0xff] %v536
    %569 = vst [vmem:[#allocation7 + $0x28] sm:$0xff] %v537
    %570 = vst [vmem:[#allocation7 + $0x30] sm:$0xff] %v538
    %571 = vst [vmem:[#allocation7 + $0x38] sm:$0xff] %v539
    %572 = vst [vmem:[#allocation7 + $0x40] sm:$0xff] %v540
    %573 = vst [vmem:[#allocation7 + $0x48] sm:$0xff] %v541
    %574 = vst [vmem:[#allocation7 + $0x50] sm:$0xff] %v542
    %575 = vst [vmem:[#allocation7 + $0x58] sm:$0xff] %v543
    %576 = vst [vmem:[#allocation7 + $0x60] sm:$0xff] %v544
    %577 = vst [vmem:[#allocation7 + $0x68] sm:$0xff] %v545
    %578 = vst [vmem:[#allocation7 + $0x70] sm:$0xff] %v546
    %579 = vst [vmem:[#allocation7 + $0x78] sm:$0xff] %v547
    %580 = vst [vmem:[#allocation7 + $0x80] sm:$0xff] %v548
    %581 = vst [vmem:[#allocation7 + $0x88] sm:$0xff] %v549
    %582 = vst [vmem:[#allocation7 + $0x90] sm:$0xff] %v550
    %583 = vst [vmem:[#allocation7 + $0x98] sm:$0xff] %v551
    %584 = vst [vmem:[#allocation7 + $0xa0] sm:$0xff] %v552
    %585 = vst [vmem:[#allocation7 + $0xa8] sm:$0xff] %v553
    %586 = vst [vmem:[#allocation7 + $0xb0] sm:$0xff] %v554
    %587 = vst [vmem:[#allocation7 + $0xb8] sm:$0xff] %v555
    %588 = vst [vmem:[#allocation7 + $0xc0] sm:$0xff] %v556
    %589 = vst [vmem:[#allocation7 + $0xc8] sm:$0xff] %v557
    %590 = vst [vmem:[#allocation7 + $0xd0] sm:$0xff] %v558
    %591 = vst [vmem:[#allocation7 + $0xd8] sm:$0xff] %v559
    %592 = vst [vmem:[#allocation7 + $0xe0] sm:$0xff] %v560
    %593 = vst [vmem:[#allocation7 + $0xe8] sm:$0xff] %v561
    %594 = vst [vmem:[#allocation7 + $0xf0] sm:$0xff] %v562
    %595 = vst [vmem:[#allocation7 + $0xf8] sm:$0xff] %v563
    // Predicated region
    $region22: #{tpu_custom_call.1} parent=1 // pred_check
      _
    $region23: #{tpu_custom_call.1} parent=1 // pred_check_branch
      %597 = sbr.rel (0) target = $region25
    $region24: #{tpu_custom_call.1} parent=1 // pred_region
      %s599 = ssub.s32 4096, 4096
      %600 = vsyncadd [#allocation4], %s599
      %s601 = sshll.u32 [#allocation7], 4
      %s602 = int_to_ptr.vmem [resolvable:$true] %s601
      %607 = dma.vmem_to_hbm [thread:$0]  %s602, 4096, %s3, [#allocation4], 128, 128, 8
    $region25: #{tpu_custom_call.1} parent=1 // pred_fallthru
      _
    // Predicated region
    $region26: #{tpu_custom_call.1} parent=1 // pred_check
      _
    $region27: #{tpu_custom_call.1} parent=1 // pred_check_branch
      %609 = sbr.rel (0) target = $region29
    $region28: #{tpu_custom_call.1} parent=1 // pred_region
      %610 = dma.done [#allocation4], 4096
    $region29: #{tpu_custom_call.1} parent=1 // pred_fallthru
      _
    %611 = vsyncpa [#allocation3], 1
    %612 = vsyncpa [#allocation6], 1
    %613 = vsyncpa [#allocation4], 1

</llo_original>
